<compile_context>
chip_gen: v5e
topology: v5e:2x2
jax: 0.10.0
libtpu: 0.0.40
codegen_flags: <defaults>
</compile_context>

<pallas_src>
from functools import partial

import jax
import jax.numpy as jnp
import numpy as np
from jax import lax
from jax.experimental import pallas as pl
from jax.experimental.pallas import tpu as pltpu


def _round_up(n, m):
    return ((n + m - 1) // m) * m


def _cdiv(a, b):
    return -(-a // b)


def _combonn_kernel(x_ref, w1_ref, b1_ref, w2_ref, b2_ref, o_ref, *, sub):
    """Fused 2-layer MLP tile, feature-major layout.

    x_ref  : (in_nch, TM)  streamed batch tile (batch on lanes)
    w1_ref : (H, in_nch)   resident weights (torch Linear layout)
    b1_ref : (H, 1)        resident bias, f32
    w2_ref : (O, H)        resident weights
    b2_ref : (O, 1)        resident bias, f32
    o_ref  : (O, TM)       lane-dense output tile
    sub    : inner lane-slice width (multiple of 128, divides TM)
    """
    tm = x_ref.shape[-1]
    n_sub = tm // sub

    # Hoisted once per tile: weights and bias broadcasts (JAX does not CSE
    # broadcast_in_dim inside the loop).
    w1 = w1_ref[...]                              # compute dtype (f32 or bf16)
    w2 = w2_ref[...].astype(jnp.float32)          # second matmul kept in f32
    b1 = b1_ref[...]                              # (H, 1) f32
    b2 = b2_ref[...]                              # (O, 1) f32

    def body(s, carry):
        off = pl.multiple_of(s * sub, sub)
        x = x_ref[:, pl.ds(off, sub)]             # (in_nch, sub)

        # hidden = relu(W1 @ x + b1), MXU accumulate in f32.
        h = jnp.dot(w1, x, preferred_element_type=jnp.float32)
        h = jnp.maximum(h + b1, 0.0)              # (H, sub) f32, stays in vregs

        # out = sigmoid(W2 @ h + b2), small f32 matmul + EUP sigmoid.
        y = jnp.dot(w2, h, preferred_element_type=jnp.float32)
        o_ref[:, pl.ds(off, sub)] = jax.nn.sigmoid(y + b2).astype(o_ref.dtype)
        return carry

    lax.fori_loop(0, n_sub, body, 0)


def combonn_single_forward_t(x_t, w1, b1, w2, b2, *,
                             block_n=32768, min_steps=2, sub_n=512,
                             compute_dtype=None, out_dtype=jnp.float32):
    """Feature-major fused forward (preferred entry point — no transposes).

    x_t : (in_nch, N)  input, batch on the last (lane) axis
    w1  : (H, in_nch)  first Linear weight (PyTorch layout)
    b1  : (H,)
    w2  : (O, H)       second Linear weight (PyTorch layout)
    b2  : (O,)
    returns (O, N) in out_dtype

    compute_dtype=jnp.bfloat16 streams x / W1 in bf16 (the dominant HBM read);
    the hidden activation and second matmul stay in f32 for accuracy.
    """
    in_nch, n = x_t.shape
    hidden = w1.shape[0]
    out_nch = w2.shape[0]

    if compute_dtype is None:
        compute_dtype = x_t.dtype
    x_t = x_t.astype(compute_dtype)
    w1 = w1.astype(compute_dtype)
    w2 = w2.astype(compute_dtype)
    # Biases stay f32 (elementwise math is done in f32 on all generations).
    b1_2d = b1.astype(jnp.float32).reshape(hidden, 1)
    b2_2d = b2.astype(jnp.float32).reshape(out_nch, 1)

    # ---- Tile selection: derive tm from a target step count --------------
    # steps >= min_steps keeps >= 2 balanced grid steps for v7x megacore;
    # tm = round_up(cdiv(n, steps), 128) bounds tail padding by ~tm/steps.
    steps = max(min_steps, _cdiv(n, block_n))
    tm = _round_up(max(_cdiv(n, steps), 1), 128)
    if tm >= sub_n:
        tm = _round_up(tm, sub_n)   # inner lane-slice must divide the tile
        sub = sub_n
    else:
        sub = tm                    # tiny batch: single inner iteration
    n_pad = steps * tm
    if n_pad != n:
        x_t = jnp.pad(x_t, ((0, 0), (0, n_pad - n)))

    grid = (steps,)

    out_itemsize = np.dtype(out_dtype).itemsize
    bytes_accessed = int(
        x_t.size * np.dtype(x_t.dtype).itemsize
        + n_pad * out_nch * out_itemsize
        + w1.size * np.dtype(w1.dtype).itemsize
        + w2.size * np.dtype(w2.dtype).itemsize
        + b1_2d.size * 4 + b2_2d.size * 4)
    cost = pl.CostEstimate(
        flops=2 * n_pad * (in_nch * hidden + hidden * out_nch),
        transcendentals=n_pad * out_nch,          # one sigmoid per output elem
        bytes_accessed=bytes_accessed)

    out = pl.pallas_call(
        partial(_combonn_kernel, sub=sub),
        out_shape=jax.ShapeDtypeStruct((out_nch, n_pad), out_dtype),
        grid=grid,
        in_specs=[
            pl.BlockSpec((in_nch, tm), lambda i: (0, i)),       # streamed x tile
            pl.BlockSpec((hidden, in_nch), lambda i: (0, 0)),   # resident W1
            pl.BlockSpec((hidden, 1), lambda i: (0, 0)),        # resident b1
            pl.BlockSpec((out_nch, hidden), lambda i: (0, 0)),  # resident W2
            pl.BlockSpec((out_nch, 1), lambda i: (0, 0)),       # resident b2
        ],
        out_specs=pl.BlockSpec((out_nch, tm), lambda i: (0, i)),
        compiler_params=pltpu.CompilerParams(
            dimension_semantics=("parallel",),     # batch axis: megacore-safe
            vmem_limit_bytes=48 * 1024 * 1024,     # < v7x's 64 MiB physical
        ),
        cost_estimate=cost,
    )(x_t, w1, b1_2d, w2, b2_2d)

    return out[:, :n]


def combonn_single_forward(x, w1, b1, w2, b2, *,
                           block_n=32768, min_steps=2, sub_n=512,
                           compute_dtype=None, out_dtype=jnp.float32):
    """PyTorch-compatible API: x (N, in_nch) -> (N, out_nch).

    NOTE: the x.T / out.T here are separate XLA HBM passes roughly as expensive
    as the kernel itself; keep activations feature-major upstream and call
    combonn_single_forward_t directly when performance matters.
    """
    out_t = combonn_single_forward_t(x.T, w1, b1, w2, b2,
                                     block_n=block_n, min_steps=min_steps,
                                     sub_n=sub_n, compute_dtype=compute_dtype,
                                     out_dtype=out_dtype)
    return out_t.T


def init_combonn_params(key, in_nch=18, hidden=32, out_nch=3):
    """nn.Linear-style init (uniform +/- 1/sqrt(fan_in)), PyTorch weight layout."""
    k1, k2, k3, k4 = jax.random.split(key, 4)
    lim1 = 1.0 / np.sqrt(in_nch)
    lim2 = 1.0 / np.sqrt(hidden)
    w1 = jax.random.uniform(k1, (hidden, in_nch), jnp.float32, -lim1, lim1)
    b1 = jax.random.uniform(k2, (hidden,), jnp.float32, -lim1, lim1)
    w2 = jax.random.uniform(k3, (out_nch, hidden), jnp.float32, -lim2, lim2)
    b2 = jax.random.uniform(k4, (out_nch,), jnp.float32, -lim2, lim2)
    return w1, b1, w2, b2


def combonn_single_ref(x, w1, b1, w2, b2):
    """Pure-JAX reference of the PyTorch forward (batch-major, f32)."""
    h = jnp.maximum(x @ w1.T + b1, 0.0)
    return jax.nn.sigmoid(h @ w2.T + b2)


# TODO(synk): only the default 2-hidden-layer instantiation (hlnum=2) is fused
# here; arbitrary hlnum/hlweights would need a generic multi-layer kernel body.

if __name__ == "__main__":
    key = jax.random.PRNGKey(0)
    kx, kp, kx2 = jax.random.split(key, 3)

    IN_NCH, HIDDEN, OUT_NCH = 18, 32, 3
    w1, b1, w2, b2 = init_combonn_params(kp, IN_NCH, HIDDEN, OUT_NCH)

    # --- small f32 check (tight tolerance, torch-compatible batch-major API) --
    N = 8
    x = jax.random.normal(kx, (N, IN_NCH), jnp.float32)
    out = jax.block_until_ready(combonn_single_forward(x, w1, b1, w2, b2))
    ref = combonn_single_ref(x, w1, b1, w2, b2)
    np.testing.assert_allclose(np.asarray(out), np.asarray(ref),
                               rtol=1e-4, atol=1e-5)

    # --- larger feature-major bf16-streamed check --------------------------
    # Exercises: multi-step grid (3 steps), step-count-derived tail padding
    # (3000 -> 3072, not 4096), and the inner 512-lane fori_loop (2 iters/tile).
    N2 = 3000
    x2_t = jax.random.normal(kx2, (IN_NCH, N2), jnp.float32)   # feature-major
    out2_t = jax.block_until_ready(
        combonn_single_forward_t(x2_t, w1, b1, w2, b2,
                                 block_n=1024, min_steps=2, sub_n=512,
                                 compute_dtype=jnp.bfloat16))
    ref2 = combonn_single_ref(x2_t.T, w1, b1, w2, b2)
    np.testing.assert_allclose(np.asarray(out2_t.T), np.asarray(ref2),
                               rtol=0.0, atol=2e-2)

    print("KERNEL_OK")
</pallas_src>

<mosaic_0001>
module attributes {stable_mosaic.version = 11 : i64} {
  func.func @_combonn_kernel(%arg0: i32, %arg1: memref<18x128xf32, #tpu.memory_space<vmem>>, %arg2: memref<32x18xf32, #tpu.memory_space<vmem>>, %arg3: memref<32x1xf32, #tpu.memory_space<vmem>>, %arg4: memref<3x32xf32, #tpu.memory_space<vmem>>, %arg5: memref<3x1xf32, #tpu.memory_space<vmem>>, %arg6: memref<3x128xf32, #tpu.memory_space<vmem>>) attributes {dimension_semantics = [#tpu.dimension_semantics<parallel>], iteration_bounds = array<i64: 2>, scalar_prefetch = 0 : i64, scratch_operands = 0 : i64, tpu.core_type = #tpu.core_type<tc>, window_params = [{transform_indices = @transform_0, window_bounds = array<i64: 18, 128>}, {pipeline_mode = #tpu.pipeline_mode<synchronous>, transform_indices = @transform_1, window_bounds = array<i64: 32, 18>}, {pipeline_mode = #tpu.pipeline_mode<synchronous>, transform_indices = @transform_2, window_bounds = array<i64: 32, 1>}, {pipeline_mode = #tpu.pipeline_mode<synchronous>, transform_indices = @transform_3, window_bounds = array<i64: 3, 32>}, {pipeline_mode = #tpu.pipeline_mode<synchronous>, transform_indices = @transform_4, window_bounds = array<i64: 3, 1>}, {transform_indices = @transform_5, window_bounds = array<i64: 3, 128>}]} {
    %c0 = arith.constant 0 : index
    %c0_0 = arith.constant 0 : index
    %0 = vector.load %arg2[%c0, %c0_0] : memref<32x18xf32, #tpu.memory_space<vmem>>, vector<32x18xf32>
    %c0_1 = arith.constant 0 : index
    %c0_2 = arith.constant 0 : index
    %1 = vector.load %arg4[%c0_1, %c0_2] : memref<3x32xf32, #tpu.memory_space<vmem>>, vector<3x32xf32>
    %c0_3 = arith.constant 0 : index
    %c0_4 = arith.constant 0 : index
    %2 = vector.load %arg3[%c0_3, %c0_4] : memref<32x1xf32, #tpu.memory_space<vmem>>, vector<32x1xf32>
    %c0_5 = arith.constant 0 : index
    %c0_6 = arith.constant 0 : index
    %3 = vector.load %arg5[%c0_5, %c0_6] : memref<3x1xf32, #tpu.memory_space<vmem>>, vector<3x1xf32>
    %c0_i32 = arith.constant 0 : i32
    %c128_i32 = arith.constant 128 : i32
    %4 = arith.muli %c0_i32, %c128_i32 : i32
    %5 = tpu.assume_multiple %4, 128 : i32
    %c0_7 = arith.constant 0 : index
    %6 = arith.index_cast %5 : i32 to index
    %7 = vector.load %arg1[%c0_7, %6] : memref<18x128xf32, #tpu.memory_space<vmem>>, vector<18x128xf32>
    %cst = arith.constant dense<0.000000e+00> : vector<32x128xf32>
    %8 = tpu.matmul %0, %7, %cst {dimension_numbers = #tpu.dot_dimension_numbers<[1], [0], [0], [1], [0, 0, 1, 1], [], []>} : vector<32x18xf32>, vector<18x128xf32>, vector<32x128xf32> -> vector<32x128xf32>
    %9 = vector.broadcast %2 : vector<32x1xf32> to vector<32x128xf32>
    %10 = arith.addf %8, %9 : vector<32x128xf32>
    %cst_8 = arith.constant 0.000000e+00 : f32
    %11 = vector.broadcast %cst_8 : f32 to vector<32x128xf32>
    %12 = arith.maximumf %10, %11 : vector<32x128xf32>
    %cst_9 = arith.constant dense<0.000000e+00> : vector<3x128xf32>
    %13 = tpu.matmul %1, %12, %cst_9 {dimension_numbers = #tpu.dot_dimension_numbers<[1], [0], [0], [1], [0, 0, 1, 1], [], []>} : vector<3x32xf32>, vector<32x128xf32>, vector<3x128xf32> -> vector<3x128xf32>
    %14 = vector.broadcast %3 : vector<3x1xf32> to vector<3x128xf32>
    %15 = arith.addf %13, %14 : vector<3x128xf32>
    %16 = arith.negf %15 : vector<3x128xf32>
    %17 = math.exp %16 : vector<3x128xf32>
    %cst_10 = arith.constant 1.000000e+00 : f32
    %18 = vector.broadcast %cst_10 : f32 to vector<3x128xf32>
    %19 = arith.addf %18, %17 : vector<3x128xf32>
    %20 = arith.divf %18, %19 : vector<3x128xf32>
    %c0_11 = arith.constant 0 : index
    %21 = arith.index_cast %5 : i32 to index
    %22 = vector.load %arg6[%c0_11, %21] : memref<3x128xf32, #tpu.memory_space<vmem>>, vector<3x128xf32>
    tpu.vector_store %arg6[%c0_11, %21], %20 {strides = array<i32>} : memref<3x128xf32, #tpu.memory_space<vmem>>, vector<3x128xf32>,
    %c1_i32 = arith.constant 1 : i32
    return
  }
  func.func @transform_0(%arg0: i32) -> (i32, i32) {
    %c0_i32 = arith.constant 0 : i32
    %c0_i32_0 = arith.constant 0 : i32
    return %c0_i32, %arg0 : i32, i32
  }
  func.func @transform_1(%arg0: i32) -> (i32, i32) {
    %c0_i32 = arith.constant 0 : i32
    %c0_i32_0 = arith.constant 0 : i32
    %c0_i32_1 = arith.constant 0 : i32
    return %c0_i32, %c0_i32_0 : i32, i32
  }
  func.func @transform_2(%arg0: i32) -> (i32, i32) {
    %c0_i32 = arith.constant 0 : i32
    %c0_i32_0 = arith.constant 0 : i32
    %c0_i32_1 = arith.constant 0 : i32
    return %c0_i32, %c0_i32_0 : i32, i32
  }
  func.func @transform_3(%arg0: i32) -> (i32, i32) {
    %c0_i32 = arith.constant 0 : i32
    %c0_i32_0 = arith.constant 0 : i32
    %c0_i32_1 = arith.constant 0 : i32
    return %c0_i32, %c0_i32_0 : i32, i32
  }
  func.func @transform_4(%arg0: i32) -> (i32, i32) {
    %c0_i32 = arith.constant 0 : i32
    %c0_i32_0 = arith.constant 0 : i32
    %c0_i32_1 = arith.constant 0 : i32
    return %c0_i32, %c0_i32_0 : i32, i32
  }
  func.func @transform_5(%arg0: i32) -> (i32, i32) {
    %c0_i32 = arith.constant 0 : i32
    %c0_i32_0 = arith.constant 0 : i32
    return %c0_i32, %arg0 : i32, i32
  }
}

</mosaic_0001>

<llo_original>
// kernel: tpu_custom_call.1
$region0: #{tpu_custom_call.1}
  #allocation0 [shape = 'u32[]', space=smem, size = 0x4, offset = 0x4, fixed_abs, tag = 'smem constant byte address 0x4 - core index']
  #allocation1 [shape = 'u32[72,128]{1,0:T(1,128)}', space=vmem, size = 0x9000, scoped, tag = 'internal scratch']
  %s0 = inlined_call_operand.vmem [shape: f32[18,256], index: 0, kind: input, shape index: {}]
  %s1 = inlined_call_operand.vmem [shape: f32[32,18], index: 1, kind: input, shape index: {}]
  %s2 = inlined_call_operand.vmem [shape: f32[32,1], index: 2, kind: input, shape index: {}]
  %s3 = inlined_call_operand.vmem [shape: f32[3,32], index: 3, kind: input, shape index: {}]
  %s4 = inlined_call_operand.vmem [shape: f32[3,1], index: 4, kind: input, shape index: {}]
  %s5 = inlined_call_operand.hbm [shape: f32[3,256], index: 5, kind: output, shape index: {}]
  %s6 = sld [smem:[#allocation0]]
  $region91: #{tpu_custom_call.1} parent=0
    _
  %s8 = ssub.s32 1, %s6
  %s9 = scalar_select 0, %s8, %s6
  $region1: #{tpu_custom_call.1} parent=0
    #allocation2 [shape = 'u8[24576]{0}', space=vmem, size = 0x6000, scoped, tag = 'input window, operand 0']
    #allocation3 [shape = 'u8[4096]{0}', space=vmem, size = 0x1000, scoped, tag = 'output window, operand 0']
    #allocation4 [shape = 's32[2]{0}', space=sflag, size = 0x8, scoped, tag = 'scoped memory for tpu_custom_call.1']
    %10 = vsyncpa [#allocation4], 0
    %s11 = scalar_lea.sflag [#allocation4], 1
    %12 = vsyncpa %s11, 0
    loop: start=0, step=1, limit=4
    $region2: #{tpu_custom_call.1} parent=1 // loop_pre_header
      _
    $region3: #{tpu_custom_call.1} parent=1 // loop_header
      %s14 = sphi 0, %s18
      %p15 = scmp.ge.s32.totalorder %s14, 4
      %s24 = sphi 0, %s26
      %s27 = sphi 0, %s24
      %s28 = sphi 0, %s27
      %s44 = sphi 0, %s28
      %s48 = sphi 0, %s48
      %s50 = sphi 0, %s48
      %s51 = sphi 0, %s50
      %s65 = sphi 0, %s51
      %s69 = sphi 0, %s69
      %s71 = sphi 0, %s69
      %s72 = sphi 0, %s71
      %s86 = sphi 0, %s72
      %s90 = sphi 0, %s90
      %s92 = sphi 0, %s90
      %s93 = sphi 0, %s92
      %s107 = sphi 0, %s93
      %s111 = sphi 0, %s111
      %s113 = sphi 0, %s111
      %s114 = sphi 0, %s113
      %s128 = sphi 0, %s114
      %s134 = sphi 0, %s136
      %s137 = sphi 0, %s134
      %s138 = sphi 0, %s137
      %s154 = sphi 0, %s138
    $region4: #{tpu_custom_call.1} parent=1 // loop_header_branch
      %17 = sbr.rel (%p15) target = $region8
    $region5: #{tpu_custom_call.1} parent=1 // loop_body
      %s19 = ssub.s32 %s14, 1
      %s20 = ssub.s32 %s14, 2
      %s21 = sadd.s32 %s14, 1
      %s22 = ssub.s32 %s14, %s21
      %p23 = scmp.eq.s32.totalorder %s22, 0
      %s25 = sadd.s32 %s24, 1
      %s26 = scalar_select %p23, %s24, %s25
      %p29 = pneg %p23
      %p30 = scmp.eq.s32.totalorder %s14, 1
      %p31 = por %p29, %p30
      %p32 = scmp.ne.s32.totalorder %s24, %s27
      %p33 = scmp.eq.s32.totalorder %s14, 0
      %p34 = por %p32, %p33
      %p35 = scmp.ne.s32.totalorder %s24, %s27
      %p36 = scmp.eq.s32.totalorder %s19, 1
      %p37 = por %p35, %p36
      %p38 = scmp.ne.s32.totalorder %s27, %s28
      %p39 = scmp.eq.s32.totalorder %s19, 0
      %p40 = por %p38, %p39
      %p41 = scmp.ne.s32.totalorder %s27, %s28
      %p42 = scmp.eq.s32.totalorder %s20, 1
      %p43 = por %p41, %p42
      %p45 = scmp.ne.s32.totalorder %s28, %s44
      %p46 = scmp.eq.s32.totalorder %s20, 0
      %p47 = por %p45, %p46
      %s49 = sadd.s32 %s48, 1
      %p52 = scmp.eq.s32.totalorder %s14, 1
      %p53 = scmp.ne.s32.totalorder %s48, %s50
      %p54 = scmp.eq.s32.totalorder %s14, 0
      %p55 = por %p53, %p54
      %p56 = scmp.ne.s32.totalorder %s48, %s50
      %p57 = scmp.eq.s32.totalorder %s19, 1
      %p58 = por %p56, %p57
      %p59 = scmp.ne.s32.totalorder %s50, %s51
      %p60 = scmp.eq.s32.totalorder %s19, 0
      %p61 = por %p59, %p60
      %p62 = scmp.ne.s32.totalorder %s50, %s51
      %p63 = scmp.eq.s32.totalorder %s20, 1
      %p64 = por %p62, %p63
      %p66 = scmp.ne.s32.totalorder %s51, %s65
      %p67 = scmp.eq.s32.totalorder %s20, 0
      %p68 = por %p66, %p67
      %s70 = sadd.s32 %s69, 1
      %p73 = scmp.eq.s32.totalorder %s14, 1
      %p74 = scmp.ne.s32.totalorder %s69, %s71
      %p75 = scmp.eq.s32.totalorder %s14, 0
      %p76 = por %p74, %p75
      %p77 = scmp.ne.s32.totalorder %s69, %s71
      %p78 = scmp.eq.s32.totalorder %s19, 1
      %p79 = por %p77, %p78
      %p80 = scmp.ne.s32.totalorder %s71, %s72
      %p81 = scmp.eq.s32.totalorder %s19, 0
      %p82 = por %p80, %p81
      %p83 = scmp.ne.s32.totalorder %s71, %s72
      %p84 = scmp.eq.s32.totalorder %s20, 1
      %p85 = por %p83, %p84
      %p87 = scmp.ne.s32.totalorder %s72, %s86
      %p88 = scmp.eq.s32.totalorder %s20, 0
      %p89 = por %p87, %p88
      %s91 = sadd.s32 %s90, 1
      %p94 = scmp.eq.s32.totalorder %s14, 1
      %p95 = scmp.ne.s32.totalorder %s90, %s92
      %p96 = scmp.eq.s32.totalorder %s14, 0
      %p97 = por %p95, %p96
      %p98 = scmp.ne.s32.totalorder %s90, %s92
      %p99 = scmp.eq.s32.totalorder %s19, 1
      %p100 = por %p98, %p99
      %p101 = scmp.ne.s32.totalorder %s92, %s93
      %p102 = scmp.eq.s32.totalorder %s19, 0
      %p103 = por %p101, %p102
      %p104 = scmp.ne.s32.totalorder %s92, %s93
      %p105 = scmp.eq.s32.totalorder %s20, 1
      %p106 = por %p104, %p105
      %p108 = scmp.ne.s32.totalorder %s93, %s107
      %p109 = scmp.eq.s32.totalorder %s20, 0
      %p110 = por %p108, %p109
      %s112 = sadd.s32 %s111, 1
      %p115 = scmp.eq.s32.totalorder %s14, 1
      %p116 = scmp.ne.s32.totalorder %s111, %s113
      %p117 = scmp.eq.s32.totalorder %s14, 0
      %p118 = por %p116, %p117
      %p119 = scmp.ne.s32.totalorder %s111, %s113
      %p120 = scmp.eq.s32.totalorder %s19, 1
      %p121 = por %p119, %p120
      %p122 = scmp.ne.s32.totalorder %s113, %s114
      %p123 = scmp.eq.s32.totalorder %s19, 0
      %p124 = por %p122, %p123
      %p125 = scmp.ne.s32.totalorder %s113, %s114
      %p126 = scmp.eq.s32.totalorder %s20, 1
      %p127 = por %p125, %p126
      %p129 = scmp.ne.s32.totalorder %s114, %s128
      %p130 = scmp.eq.s32.totalorder %s20, 0
      %p131 = por %p129, %p130
      %s132 = ssub.s32 %s14, %s21
      %p133 = scmp.eq.s32.totalorder %s132, 0
      %s135 = sadd.s32 %s134, 1
      %s136 = scalar_select %p133, %s134, %s135
      %p139 = pneg %p133
      %p140 = scmp.eq.s32.totalorder %s14, 1
      %p141 = por %p139, %p140
      %p142 = scmp.ne.s32.totalorder %s134, %s137
      %p143 = scmp.eq.s32.totalorder %s14, 0
      %p144 = por %p142, %p143
      %p145 = scmp.ne.s32.totalorder %s134, %s137
      %p146 = scmp.eq.s32.totalorder %s19, 1
      %p147 = por %p145, %p146
      %p148 = scmp.ne.s32.totalorder %s137, %s138
      %p149 = scmp.eq.s32.totalorder %s19, 0
      %p150 = por %p148, %p149
      %p151 = scmp.ne.s32.totalorder %s137, %s138
      %p152 = scmp.eq.s32.totalorder %s20, 1
      %p153 = por %p151, %p152
      %p155 = scmp.ne.s32.totalorder %s138, %s154
      %p156 = scmp.eq.s32.totalorder %s20, 0
      %p157 = por %p155, %p156
      %p158 = scmp.le.s32.totalorder 1, %s14
      %p159 = scmp.lt.s32.totalorder %s14, 3
      %p160 = pnand %p158, %p159
      %p161 = pneg %p160
      // Predicated region
      $region9: #{tpu_custom_call.1} parent=5 // pred_check
        _
      $region10: #{tpu_custom_call.1} parent=5 // pred_check_branch
        %163 = sbr.rel (%p160) target = $region12
      $region11: #{tpu_custom_call.1} parent=5 // pred_region
        %s164 = ssub.s32 %s14, 1
        // Predicated region
        $region13: #{tpu_custom_call.1} parent=11 // pred_check
          %p165 = pneg %p61
        $region14: #{tpu_custom_call.1} parent=11 // pred_check_branch
          %167 = sbr.rel (%p165) target = $region16
        $region15: #{tpu_custom_call.1} parent=11 // pred_region
          _
        $region16: #{tpu_custom_call.1} parent=11 // pred_fallthru
          _
        // Predicated region
        $region17: #{tpu_custom_call.1} parent=11 // pred_check
          %p168 = pneg %p82
        $region18: #{tpu_custom_call.1} parent=11 // pred_check_branch
          %170 = sbr.rel (%p168) target = $region20
        $region19: #{tpu_custom_call.1} parent=11 // pred_region
          _
        $region20: #{tpu_custom_call.1} parent=11 // pred_fallthru
          _
        // Predicated region
        $region21: #{tpu_custom_call.1} parent=11 // pred_check
          %p171 = pneg %p103
        $region22: #{tpu_custom_call.1} parent=11 // pred_check_branch
          %173 = sbr.rel (%p171) target = $region24
        $region23: #{tpu_custom_call.1} parent=11 // pred_region
          _
        $region24: #{tpu_custom_call.1} parent=11 // pred_fallthru
          _
        // Predicated region
        $region25: #{tpu_custom_call.1} parent=11 // pred_check
          %p174 = pneg %p124
        $region26: #{tpu_custom_call.1} parent=11 // pred_check_branch
          %176 = sbr.rel (%p174) target = $region28
        $region27: #{tpu_custom_call.1} parent=11 // pred_region
          _
        $region28: #{tpu_custom_call.1} parent=11 // pred_fallthru
          _
      $region12: #{tpu_custom_call.1} parent=5 // pred_fallthru
        _
      %p177 = scmp.lt.s32.totalorder %s14, 2
      // Predicated region
      $region29: #{tpu_custom_call.1} parent=5 // pred_check
        %p178 = pneg %p177
      $region30: #{tpu_custom_call.1} parent=5 // pred_check_branch
        %180 = sbr.rel (%p178) target = $region32
      $region31: #{tpu_custom_call.1} parent=5 // pred_region
        // Predicated region
        $region33: #{tpu_custom_call.1} parent=31 // pred_check
          %p181 = pneg %p34
        $region34: #{tpu_custom_call.1} parent=31 // pred_check_branch
          %183 = sbr.rel (%p181) target = $region36
        $region35: #{tpu_custom_call.1} parent=31 // pred_region
          %s184 = sand.u32 %s24, 1
          %s185 = sand.u32 %s24, 1
          %s186 = smul.addr %s185, 24
          %s187 = scalar_lea.vmem [#allocation2], %s186
          %s188 = smul.addr %s14, 8
          %s189 = scalar_lea.vmem %s0, %s188
          // Predicated region
          $region37: #{tpu_custom_call.1} parent=35 // pred_check
            _
          $region38: #{tpu_custom_call.1} parent=35 // pred_check_branch
            %191 = sbr.rel (0) target = $region40
          $region39: #{tpu_custom_call.1} parent=35 // pred_region
            // Predicated region
            $region41: #{tpu_custom_call.1} parent=39 // pred_check
              _
            $region42: #{tpu_custom_call.1} parent=39 // pred_check_branch
              %193 = sbr.rel (0) target = $region44
            $region43: #{tpu_custom_call.1} parent=39 // pred_region
              // Predicated region
              $region56: #{tpu_custom_call.1} parent=43 // pred_check
                _
              $region57: #{tpu_custom_call.1} parent=43 // pred_check_branch
                %213 = sbr.rel (0) target = $region59
              $region58: #{tpu_custom_call.1} parent=43 // pred_region
                loop: start=0, step=1, limit=1
                $region60: #{tpu_custom_call.1} parent=58 // loop_pre_header
                  _
                $region61: #{tpu_custom_call.1} parent=58 // loop_header
                  %s215 = sphi 0, %s219
                  %p216 = scmp.ge.s32.totalorder %s215, 1
                  %s220 = sphi %s189, %s189
                  %s221 = sphi %s187, %s187
                $region62: #{tpu_custom_call.1} parent=58 // loop_header_branch
                  %218 = sbr.rel (%p216) target = $region66
                $region63: #{tpu_custom_call.1} parent=58 // loop_body
                  %v222 = vld [vmem:[%s220] sm:$0xff]
                  %223 = vst [vmem:[%s221] sm:$0xff] %v222
                  %v224 = vld [vmem:[%s220 + $0x10] sm:$0xff]
                  %225 = vst [vmem:[%s221 + $0x8] sm:$0xff] %v224
                  %v226 = vld [vmem:[%s220 + $0x20] sm:$0xff]
                  %227 = vst [vmem:[%s221 + $0x10] sm:$0xff] %v226
                $region64: #{tpu_custom_call.1} parent=58 // loop_footer
                  %s219 = sadd.s32 1, %s215
                $region65: #{tpu_custom_call.1} parent=58 // loop_footer_branch
                  %214 = sbr.rel target = $region61
                $region66: #{tpu_custom_call.1} parent=58 // loop_exit
                  _
              $region59: #{tpu_custom_call.1} parent=43 // pred_fallthru
                _
              // Predicated region
              $region67: #{tpu_custom_call.1} parent=43 // pred_check
                _
              $region68: #{tpu_custom_call.1} parent=43 // pred_check_branch
                %229 = sbr.rel target = $region70
              $region69: #{tpu_custom_call.1} parent=43 // pred_region
                _
              $region70: #{tpu_custom_call.1} parent=43 // pred_fallthru
                _
            $region44: #{tpu_custom_call.1} parent=39 // pred_fallthru
              _
            // Predicated region
            $region45: #{tpu_custom_call.1} parent=39 // pred_check
              _
            $region46: #{tpu_custom_call.1} parent=39 // pred_check_branch
              %195 = sbr.rel target = $region48
            $region47: #{tpu_custom_call.1} parent=39 // pred_region
              %s197 = ssub.s32 256, 1
              loop: start=0, step=1, limit=1
              $region49: #{tpu_custom_call.1} parent=47 // loop_pre_header
                _
              $region50: #{tpu_custom_call.1} parent=47 // loop_header
                %s199 = sphi 0, %s203
                %p200 = scmp.ge.s32.totalorder %s199, 1
                %s204 = sphi %s189, %s189
                %s205 = sphi %s187, %s187
              $region51: #{tpu_custom_call.1} parent=47 // loop_header_branch
                %202 = sbr.rel (%p200) target = $region55
              $region52: #{tpu_custom_call.1} parent=47 // loop_body
                %v206 = vld [vmem:[%s204] sm:%s197]
                %207 = vst [vmem:[%s205] sm:%s197] %v206
                %v208 = vld [vmem:[%s204 + $0x10] sm:%s197]
                %209 = vst [vmem:[%s205 + $0x8] sm:%s197] %v208
                %v210 = vld [vmem:[%s204 + $0x20] sm:%s197]
                %211 = vst [vmem:[%s205 + $0x10] sm:%s197] %v210
              $region53: #{tpu_custom_call.1} parent=47 // loop_footer
                %s203 = sadd.s32 1, %s199
              $region54: #{tpu_custom_call.1} parent=47 // loop_footer_branch
                %198 = sbr.rel target = $region50
              $region55: #{tpu_custom_call.1} parent=47 // loop_exit
                _
            $region48: #{tpu_custom_call.1} parent=39 // pred_fallthru
              _
          $region40: #{tpu_custom_call.1} parent=35 // pred_fallthru
            _
          %230 = vnop
        $region36: #{tpu_custom_call.1} parent=31 // pred_fallthru
          _
      $region32: #{tpu_custom_call.1} parent=5 // pred_fallthru
        _
      %p231 = scmp.le.s32.totalorder 1, %s14
      %p232 = scmp.lt.s32.totalorder %s14, 3
      %p233 = pnand %p231, %p232
      %p234 = pneg %p233
      // Predicated region
      $region71: #{tpu_custom_call.1} parent=5 // pred_check
        _
      $region72: #{tpu_custom_call.1} parent=5 // pred_check_branch
        %236 = sbr.rel (%p233) target = $region74
      $region73: #{tpu_custom_call.1} parent=5 // pred_region
        %s237 = ssub.s32 %s14, 1
        %s238 = sand.u32 %s27, 1
        %s239 = sand.u32 %s27, 1
        %s240 = smul.addr %s239, 24
        %s241 = scalar_lea.vmem [#allocation2], %s240
        // Predicated region
        $region75: #{tpu_custom_call.1} parent=73 // pred_check
          %p242 = pneg %p40
        $region76: #{tpu_custom_call.1} parent=73 // pred_check_branch
          %244 = sbr.rel (%p242) target = $region78
        $region77: #{tpu_custom_call.1} parent=73 // pred_region
          _
        $region78: #{tpu_custom_call.1} parent=73 // pred_fallthru
          _
        %s245 = sand.u32 %s27, 1
        %s246 = sand.u32 %s27, 1
        %s247 = smul.addr %s246, 24
        %s248 = scalar_lea.vmem [#allocation2], %s247
        %p249 = pneg %p40
        %p250 = pneg %p37
        %p251 = pneg %p61
        %p252 = pneg %p58
        %p253 = pneg %p82
        %p254 = pneg %p79
        %p255 = pneg %p103
        %p256 = pneg %p100
        %p257 = pneg %p124
        %p258 = pneg %p121
        %p259 = pneg %p150
        %p260 = pneg %p147
        %s261 = sand.u32 %s137, 1
        %s262 = scalar_lea.sflag [#allocation4], %s261
        %s263 = sand.u32 %s137, 1
        %s264 = smul.addr %s263, 4
        %s265 = scalar_lea.vmem [#allocation3], %s264
        %v266 = vld [vmem:[%s1] sm:$0xff]
        %v267 = vld [vmem:[%s1 + $0x8] sm:$0xff]
        %v268 = vld [vmem:[%s1 + $0x10] sm:$0xff]
        %v269 = vld [vmem:[%s1 + $0x18] sm:$0xff]
        %v270 = vld [vmem:[%s3] sm:$0x7]
        %v271 = vld [vmem:[%s2] sm:$0xff]
        %v272 = vld [vmem:[%s2 + $0x8] sm:$0xff]
        %v273 = vld [vmem:[%s2 + $0x10] sm:$0xff]
        %v274 = vld [vmem:[%s2 + $0x18] sm:$0xff]
        %v275 = vld [vmem:[%s4] sm:$0x7]
        %v276 = vld [vmem:[%s241] sm:$0xff]
        %v277 = vld [vmem:[%s241 + $0x8] sm:$0xff]
        %v278 = vld [vmem:[%s241 + $0x10] sm:$0x3]
        %280 = vset.pattern.permute.xlu0 0
        %281 = vperm.xlu0 %280, %v271
        %v282 = vpop.permute.xlu0 %281
        %285 = vset.pattern.permute.xlu0 0
        %286 = vperm.xlu0 %285, %v272
        %v287 = vpop.permute.xlu0 %286
        %290 = vset.pattern.permute.xlu0 0
        %291 = vperm.xlu0 %290, %v273
        %v292 = vpop.permute.xlu0 %291
        %295 = vset.pattern.permute.xlu0 0
        %296 = vperm.xlu0 %295, %v274
        %v297 = vpop.permute.xlu0 %296
        %vm299 = vcmask 146432
        %v301 = vsel %vm299, %v266, 0
        %v304 = vsel %vm299, %v267, 0
        %v307 = vsel %vm299, %v268, 0
        %v310 = vsel %vm299, %v269, 0
        %vm312 = vcmask 1041408
        %v314 = vsel %vm312, %v278, 0
        %316 = vmatpush.msra.mxu0 0.0
        %317 = vmatpush.msra.mxu0 0.0
        %318 = vmatpush.msra.mxu0 0.0
        %319 = vmatpush.msra.mxu0 0.0
        %320 = vmatpush.msra.mxu0 0.0
        %321 = vmatpush.msra.mxu0 0.0
        %322 = vmatpush.msra.mxu0 0.0
        %323 = vmatpush.msra.mxu0 0.0
        %324 = vmatpush.msra.mxu0 0.0
        %325 = vmatpush.msra.mxu0 0.0
        %326 = vmatpush.msra.mxu0 0.0
        %327 = vmatpush.msra.mxu0 0.0
        %328 = vmatpush.msra.mxu0 0.0
        %329 = vmatpush.msra.mxu0 %v314
        %330 = vmatpush.msra.mxu0 %v277
        %331 = vmatpush.msra.mxu0 %v276
        %332 = vmatmul.f32.gmra.mxu0 %v301
        %v333 = vpop.f32.mrf.mxu0
        %v334 = vadd.f32 %v282, %v333
        %335 = vmatmul.f32.gmra.mxu0 %v304
        %v336 = vpop.f32.mrf.mxu0
        %v337 = vadd.f32 %v287, %v336
        %338 = vmatmul.f32.gmra.mxu0 %v307
        %v339 = vpop.f32.mrf.mxu0
        %v340 = vadd.f32 %v292, %v339
        %341 = vmatmul.f32.gmra.mxu0 %v310
        %v342 = vpop.f32.mrf.mxu0
        %v343 = vadd.f32 %v297, %v342
        %344 = vdwg.mxu0
        %v345 = vmax.f32 %v334, 0.0
        %v346 = vmax.f32 %v337, 0.0
        %v347 = vmax.f32 %v340, 0.0
        %v348 = vmax.f32 %v343, 0.0
        %350 = vset.pattern.permute.xlu0 0
        %351 = vperm.xlu0 %350, %v275
        %v352 = vpop.permute.xlu0 %351
        %vm354 = vcmask 261120
        %v356 = vsel %vm354, %v270, 0
        %358 = vmatpush.msra.mxu0 0.0
        %359 = vmatpush.msra.mxu0 0.0
        %360 = vmatpush.msra.mxu0 0.0
        %361 = vmatpush.msra.mxu0 0.0
        %362 = vmatpush.msra.mxu0 0.0
        %363 = vmatpush.msra.mxu0 0.0
        %364 = vmatpush.msra.mxu0 0.0
        %365 = vmatpush.msra.mxu0 0.0
        %366 = vmatpush.msra.mxu0 0.0
        %367 = vmatpush.msra.mxu0 0.0
        %368 = vmatpush.msra.mxu0 0.0
        %369 = vmatpush.msra.mxu0 0.0
        %370 = vmatpush.msra.mxu0 %v348
        %371 = vmatpush.msra.mxu0 %v347
        %372 = vmatpush.msra.mxu0 %v346
        %373 = vmatpush.msra.mxu0 %v345
        %374 = vmatmul.f32.gmra.mxu0 %v356
        %v375 = vpop.f32.mrf.mxu0
        %v376 = vadd.f32 %v352, %v375
        %377 = vdwg.mxu0
        %v378 = vxor.u32 %v376, 2147483648
        %v379 = vmul.f32 %v378, 1.442695
        %v380 = vpow.pop %v379
        %v381 = vadd.f32 %v380, 1.0
        %v382 = vrcp.pop %v381
        %v383 = vmul.f32 %v381, %v382
        %v384 = vsub.f32 1.0, %v383
        %v385 = vmul.f32 %v382, %v384
        %v386 = vadd.f32 %v382, %v385
        %vm387 = vweird.f32 %v381
        %vm388 = vweird.f32 %v382
        %vm389 = vmor %vm387, %vm388
        %v390 = vsel %vm389, %v382, %v386
        %v391 = vand.u32 2147483647, %v381
        %vm392 = vcmp.eq.f32.partialorder %v391, 8.507059e+37
        %v393 = vand.u32 %v381, 2147483648
        %v394 = vor.u32 1.1754944e-38, %v393
        %v395 = vsel %vm392, %v394, %v390
        %v396 = vmul.f32 1.0, %v395
        %397 = vst [vmem:[%s265] sm:$0x7] %v396
        %s398 = sand.u32 %s137, 1
        %s399 = scalar_lea.sflag [#allocation4], %s398
        %s400 = sand.u32 %s137, 1
        %s401 = smul.addr %s400, 4
        %s402 = scalar_lea.vmem [#allocation3], %s401
        // Predicated region
        $region79: #{tpu_custom_call.1} parent=73 // pred_check
          %p403 = pneg %p147
        $region80: #{tpu_custom_call.1} parent=73 // pred_check_branch
          %405 = sbr.rel (%p403) target = $region82
        $region81: #{tpu_custom_call.1} parent=73 // pred_region
          %407 = vsyncadd %s399, 0
          %s408 = smul.addr %s19, 4
          %s409 = scalar_lea.hbm %s5, %s408
          %s411 = sshll.u32 %s402, 4
          %s412 = int_to_ptr.vmem [resolvable:$true] %s411
          %s413 = sshll.u32 %s409, 4
          %s414 = int_to_ptr.hbm [resolvable:$true] %s413
          %416 = dma.vmem_to_hbm [thread:$0]  %s412, 64, %s414, %s399
        $region82: #{tpu_custom_call.1} parent=73 // pred_fallthru
          _
      $region74: #{tpu_custom_call.1} parent=5 // pred_fallthru
        _
      %p417 = scmp.le.s32.totalorder 2, %s14
      // Predicated region
      $region83: #{tpu_custom_call.1} parent=5 // pred_check
        %p418 = pneg %p417
      $region84: #{tpu_custom_call.1} parent=5 // pred_check_branch
        %420 = sbr.rel (%p418) target = $region86
      $region85: #{tpu_custom_call.1} parent=5 // pred_region
        %s421 = ssub.s32 %s14, 2
        // Predicated region
        $region87: #{tpu_custom_call.1} parent=85 // pred_check
          %p422 = pneg %p153
        $region88: #{tpu_custom_call.1} parent=85 // pred_check_branch
          %424 = sbr.rel (%p422) target = $region90
        $region89: #{tpu_custom_call.1} parent=85 // pred_region
          %s425 = sand.u32 %s138, 1
          %s426 = scalar_lea.sflag [#allocation4], %s425
          %s427 = sand.u32 %s138, 1
          %s428 = smul.addr %s427, 4
          %s429 = scalar_lea.vmem [#allocation3], %s428
          %431 = dma.done %s426, 64
        $region90: #{tpu_custom_call.1} parent=85 // pred_fallthru
          _
      $region86: #{tpu_custom_call.1} parent=5 // pred_fallthru
        _
    $region6: #{tpu_custom_call.1} parent=1 // loop_footer
      %s18 = sadd.s32 1, %s14
    $region7: #{tpu_custom_call.1} parent=1 // loop_footer_branch
      %13 = sbr.rel target = $region3
    $region8: #{tpu_custom_call.1} parent=1 // loop_exit
      _
    %432 = vsyncpa [#allocation4], 1
    %s433 = scalar_lea.sflag [#allocation4], 1
    %434 = vsyncpa %s433, 1

</llo_original>
